<compile_context>
chip_gen: v6e
topology: v6e:2x2x1
jax: 0.10.0
libtpu: 0.0.40
codegen_flags: <defaults>
</compile_context>

<pallas_src>
import functools

import jax
import jax.numpy as jnp
from jax.experimental import pallas as pl
from jax.experimental.pallas import tpu as pltpu


def _round_up(x: int, m: int) -> int:
    return ((x + m - 1) // m) * m


def _pick_block_rows(batch: int, num_classes: int, itemsize: int,
                     target_block_bytes: int = 4 * 1024 * 1024) -> int:
    """Pick a sublane-aligned batch tile sized for ~4 MiB of logits per buffer."""
    rows = target_block_bytes // max(1, num_classes * itemsize)
    rows = max(8, (rows // 8) * 8)
    rows = min(rows, 1024)
    rows = min(rows, _round_up(batch, 8))
    return int(rows)


def _ce_label_smooth_kernel(logits_ref, targets_ref, out_ref, acc_ref, *,
                            epsilon: float, num_classes: int, batch: int,
                            block_rows: int, reduction: bool):
    i = pl.program_id(0)

    x = logits_ref[...].astype(jnp.float32)            # (TB, C)
    t = targets_ref[...]                               # (TB, 1) int32

    # Numerically stable log-sum-exp over the class (lane) axis.
    m = jnp.max(x, axis=1, keepdims=True)              # (TB, 1)
    shifted = x - m                                    # (TB, C)
    lse = jnp.log(jnp.sum(jnp.exp(shifted), axis=1, keepdims=True))  # (TB, 1)

    # Smoothed-CE without materializing log_probs / onehot / smooth:
    #   loss = (1-eps)*(lse - shifted[target]) + eps*(lse - mean_c(shifted))
    class_ids = jax.lax.broadcasted_iota(jnp.int32, x.shape, 1)
    shifted_t = jnp.sum(jnp.where(class_ids == t, shifted, 0.0),
                        axis=1, keepdims=True)         # (TB, 1)
    mean_shift = jnp.sum(shifted, axis=1, keepdims=True) * (1.0 / num_classes)

    per_sample = ((1.0 - epsilon) * (lse - shifted_t)
                  + epsilon * (lse - mean_shift))       # (TB, 1)

    if reduction:
        # Mask batch-padding rows, accumulate the global sum fully on-chip.
        row_ids = (i * block_rows
                   + jax.lax.broadcasted_iota(jnp.int32, per_sample.shape, 0))
        tile_sum = jnp.sum(jnp.where(row_ids < batch, per_sample, 0.0))

        @pl.when(i == 0)
        def _():
            acc_ref[...] = jnp.zeros_like(acc_ref)

        acc_ref[...] += tile_sum

        @pl.when(i == pl.num_programs(0) - 1)
        def _():
            out_ref[...] = acc_ref[...] * (1.0 / batch)
    else:
        out_ref[...] = per_sample


def cross_entropy_label_smooth(logits, targets, *, epsilon: float = 0.1,
                               reduction: bool = True, block_rows=None):
    """logits: (B, C) float (f32 or bf16); targets: (B,) int class indices."""
    B, C = logits.shape
    itemsize = jnp.dtype(logits.dtype).itemsize

    if block_rows is None:
        tb = _pick_block_rows(B, C, itemsize)
    else:
        tb = max(8, (int(block_rows) // 8) * 8)
        tb = min(tb, _round_up(B, 8))

    b_pad = _round_up(B, tb)
    num_tiles = b_pad // tb

    if b_pad != B:
        logits = jnp.pad(logits, ((0, b_pad - B), (0, 0)))
        targets = jnp.pad(targets, ((0, b_pad - B),))
    targets_2d = targets.astype(jnp.int32).reshape(b_pad, 1)

    if reduction:
        out_shape = jax.ShapeDtypeStruct((1, 1), jnp.float32)
        out_spec = pl.BlockSpec((1, 1), lambda i: (0, 0))   # resident accumulator
        dims = ("arbitrary",)
    else:
        out_shape = jax.ShapeDtypeStruct((b_pad, 1), jnp.float32)
        out_spec = pl.BlockSpec((tb, 1), lambda i: (i, 0))
        dims = ("parallel",)

    kernel = functools.partial(
        _ce_label_smooth_kernel,
        epsilon=float(epsilon), num_classes=int(C), batch=int(B),
        block_rows=int(tb), reduction=bool(reduction))

    block_bytes = tb * C * itemsize
    # 2x double-buffered logits + targets + headroom, capped under v7x VMEM.
    vmem_limit = int(min(max(4 * block_bytes + (2 << 20), 16 << 20), 48 << 20))

    out = pl.pallas_call(
        kernel,
        out_shape=out_shape,
        grid_spec=pltpu.PrefetchScalarGridSpec(
            num_scalar_prefetch=0,
            grid=(num_tiles,),
            in_specs=[
                pl.BlockSpec((tb, C), lambda i: (i, 0)),
                pl.BlockSpec((tb, 1), lambda i: (i, 0)),
            ],
            out_specs=out_spec,
            scratch_shapes=[pltpu.VMEM((1, 1), jnp.float32)],
        ),
        compiler_params=pltpu.CompilerParams(
            dimension_semantics=dims,
            vmem_limit_bytes=vmem_limit),
    )(logits, targets_2d)

    if reduction:
        return out[0, 0]          # scalar, matches loss.mean()
    return out[:B, 0]             # (B,), matches per-sample loss


def _reference(logits, targets, epsilon=0.1, reduction=True):
    # Pure-JAX reference mirroring the PyTorch module.
    log_probs = jax.nn.log_softmax(logits.astype(jnp.float32), axis=1)
    num_classes = logits.shape[1]
    onehot = jax.nn.one_hot(targets, num_classes, dtype=jnp.float32)
    smooth = (1.0 - epsilon) * onehot + epsilon / num_classes
    loss = jnp.sum(-smooth * log_probs, axis=1)
    return jnp.mean(loss) if reduction else loss


if __name__ == "__main__":
    key = jax.random.PRNGKey(0)
    k1, k2, k3, k4 = jax.random.split(key, 4)

    # Case 1: small, single tile.
    B1, C1 = 8, 16
    logits1 = jax.random.normal(k1, (B1, C1), dtype=jnp.float32)
    targets1 = jax.random.randint(k2, (B1,), 0, C1, dtype=jnp.int32)

    loss = jax.block_until_ready(
        cross_entropy_label_smooth(logits1, targets1, epsilon=0.1, reduction=True))
    ref = _reference(logits1, targets1, 0.1, True)
    assert jnp.allclose(loss, ref, atol=1e-5, rtol=1e-5), (loss, ref)

    loss_vec = jax.block_until_ready(
        cross_entropy_label_smooth(logits1, targets1, epsilon=0.1, reduction=False))
    ref_vec = _reference(logits1, targets1, 0.1, False)
    assert jnp.allclose(loss_vec, ref_vec, atol=1e-5, rtol=1e-5), (loss_vec, ref_vec)

    # Case 2: batch not a multiple of 8 (exercises padding + mask).
    B2, C2 = 6, 16
    logits2 = jax.random.normal(k3, (B2, C2), dtype=jnp.float32)
    targets2 = jax.random.randint(k4, (B2,), 0, C2, dtype=jnp.int32)
    loss2 = jax.block_until_ready(
        cross_entropy_label_smooth(logits2, targets2, reduction=True))
    assert jnp.allclose(loss2, _reference(logits2, targets2, 0.1, True),
                        atol=1e-5, rtol=1e-5)
    loss2_vec = jax.block_until_ready(
        cross_entropy_label_smooth(logits2, targets2, reduction=False))
    assert jnp.allclose(loss2_vec, _reference(logits2, targets2, 0.1, False),
                        atol=1e-5, rtol=1e-5)

    # Case 3: forced multi-tile grid (exercises the cross-tile accumulator
    # and the parallel per-sample path).
    B3, C3 = 32, 16
    logits3 = jax.random.normal(k1, (B3, C3), dtype=jnp.float32)
    targets3 = jax.random.randint(k2, (B3,), 0, C3, dtype=jnp.int32)
    loss3 = jax.block_until_ready(
        cross_entropy_label_smooth(logits3, targets3, reduction=True, block_rows=8))
    assert jnp.allclose(loss3, _reference(logits3, targets3, 0.1, True),
                        atol=1e-5, rtol=1e-5)
    loss3_vec = jax.block_until_ready(
        cross_entropy_label_smooth(logits3, targets3, reduction=False, block_rows=8))
    assert jnp.allclose(loss3_vec, _reference(logits3, targets3, 0.1, False),
                        atol=1e-5, rtol=1e-5)

    print("KERNEL_OK")
</pallas_src>

<mosaic_0001>
module attributes {stable_mosaic.version = 11 : i64} {
  func.func @_ce_label_smooth_kernel(%arg0: i32, %arg1: memref<8x16xf32, #tpu.memory_space<vmem>>, %arg2: memref<8x1xi32, #tpu.memory_space<vmem>>, %arg3: memref<1x1xf32, #tpu.memory_space<vmem>>, %arg4: memref<1x1xf32, #tpu.memory_space<vmem>>) attributes {dimension_semantics = [#tpu.dimension_semantics<arbitrary>], iteration_bounds = array<i64: 1>, scalar_prefetch = 0 : i64, scratch_operands = 1 : i64, tpu.core_type = #tpu.core_type<tc>, window_params = [{transform_indices = @transform_0, window_bounds = array<i64: 8, 16>}, {transform_indices = @transform_1, window_bounds = array<i64: 8, 1>}, {pipeline_mode = #tpu.pipeline_mode<synchronous>, transform_indices = @transform_2, window_bounds = array<i64: 1, 1>}]} {
    %c0 = arith.constant 0 : index
    %c0_0 = arith.constant 0 : index
    %0 = vector.load %arg1[%c0, %c0_0] : memref<8x16xf32, #tpu.memory_space<vmem>>, vector<8x16xf32>
    %c0_1 = arith.constant 0 : index
    %c0_2 = arith.constant 0 : index
    %1 = vector.load %arg2[%c0_1, %c0_2] : memref<8x1xi32, #tpu.memory_space<vmem>>, vector<8x1xi32>
    %cst = arith.constant dense<0xFF800000> : vector<8xf32>
    %2 = vector.multi_reduction <maximumf>, %0, %cst [1] : vector<8x16xf32> to vector<8xf32>
    %3 = vector.shape_cast %2 : vector<8xf32> to vector<8x1xf32>
    %4 = vector.broadcast %3 : vector<8x1xf32> to vector<8x16xf32>
    %5 = arith.subf %0, %4 : vector<8x16xf32>
    %6 = math.exp %5 : vector<8x16xf32>
    %cst_3 = arith.constant dense<0.000000e+00> : vector<8xf32>
    %7 = vector.multi_reduction <add>, %6, %cst_3 [1] : vector<8x16xf32> to vector<8xf32>
    %8 = vector.shape_cast %7 : vector<8xf32> to vector<8x1xf32>
    %9 = math.log %8 : vector<8x1xf32>
    %10 = tpu.iota {dimensions = array<i32: 1>} : vector<8x16xi32>
    %11 = vector.broadcast %1 : vector<8x1xi32> to vector<8x16xi32>
    %12 = arith.cmpi eq, %10, %11 : vector<8x16xi32>
    %cst_4 = arith.constant 0.000000e+00 : f32
    %13 = vector.broadcast %cst_4 : f32 to vector<8x16xf32>
    %14 = arith.select %12, %5, %13 : vector<8x16xi1>, vector<8x16xf32>
    %cst_5 = arith.constant dense<0.000000e+00> : vector<8xf32>
    %15 = vector.multi_reduction <add>, %14, %cst_5 [1] : vector<8x16xf32> to vector<8xf32>
    %16 = vector.shape_cast %15 : vector<8xf32> to vector<8x1xf32>
    %cst_6 = arith.constant dense<0.000000e+00> : vector<8xf32>
    %17 = vector.multi_reduction <add>, %5, %cst_6 [1] : vector<8x16xf32> to vector<8xf32>
    %18 = vector.shape_cast %17 : vector<8xf32> to vector<8x1xf32>
    %cst_7 = arith.constant 6.250000e-02 : f32
    %19 = vector.broadcast %cst_7 : f32 to vector<8x1xf32>
    %20 = arith.mulf %18, %19 : vector<8x1xf32>
    %21 = arith.subf %9, %16 : vector<8x1xf32>
    %cst_8 = arith.constant 0.899999976 : f32
    %22 = vector.broadcast %cst_8 : f32 to vector<8x1xf32>
    %23 = arith.mulf %22, %21 : vector<8x1xf32>
    %24 = arith.subf %9, %20 : vector<8x1xf32>
    %cst_9 = arith.constant 1.000000e-01 : f32
    %25 = vector.broadcast %cst_9 : f32 to vector<8x1xf32>
    %26 = arith.mulf %25, %24 : vector<8x1xf32>
    %27 = arith.addf %23, %26 : vector<8x1xf32>
    %c8_i32 = arith.constant 8 : i32
    %28 = arith.muli %arg0, %c8_i32 : i32
    %29 = tpu.iota {dimensions = array<i32: 0>} : vector<8x1xi32>
    %30 = vector.broadcast %28 : i32 to vector<8x1xi32>
    %31 = arith.addi %30, %29 : vector<8x1xi32>
    %c8_i32_10 = arith.constant 8 : i32
    %32 = vector.broadcast %c8_i32_10 : i32 to vector<8x1xi32>
    %33 = arith.cmpi slt, %31, %32 : vector<8x1xi32>
    %cst_11 = arith.constant 0.000000e+00 : f32
    %34 = vector.broadcast %cst_11 : f32 to vector<8x1xf32>
    %35 = arith.select %33, %27, %34 : vector<8x1xi1>, vector<8x1xf32>
    %36 = vector.shape_cast %35 : vector<8x1xf32> to vector<1x8x1xf32>
    %cst_12 = arith.constant dense<0.000000e+00> : vector<1xf32>
    %37 = vector.multi_reduction <add>, %36, %cst_12 [1, 2] : vector<1x8x1xf32> to vector<1xf32>
    %38 = vector.shape_cast %37 : vector<1xf32> to vector<1x1x1xf32>
    %39 = vector.extract %38[0, 0, 0] : f32 from vector<1x1x1xf32>
    %c0_i32 = arith.constant 0 : i32
    %40 = arith.cmpi eq, %arg0, %c0_i32 : i32
    %41 = arith.extui %40 : i1 to i32
    %c0_i32_13 = arith.constant 0 : i32
    %42 = arith.cmpi ne, %41, %c0_i32_13 : i32
    scf.if %42 {
      %cst_20 = arith.constant 0.000000e+00 : f32
      %50 = vector.broadcast %cst_20 : f32 to vector<1x1xf32>
      %c0_21 = arith.constant 0 : index
      %c0_22 = arith.constant 0 : index
      %51 = vector.load %arg4[%c0_21, %c0_22] : memref<1x1xf32, #tpu.memory_space<vmem>>, vector<1x1xf32>
      tpu.vector_store %arg4[%c0_21, %c0_22], %50 {strides = array<i32>} : memref<1x1xf32, #tpu.memory_space<vmem>>, vector<1x1xf32>,
    } else {
    }
    %c0_14 = arith.constant 0 : index
    %c0_15 = arith.constant 0 : index
    %43 = vector.load %arg4[%c0_14, %c0_15] : memref<1x1xf32, #tpu.memory_space<vmem>>, vector<1x1xf32>
    %44 = vector.broadcast %39 : f32 to vector<1x1xf32>
    %45 = arith.addf %43, %44 : vector<1x1xf32>
    %c0_16 = arith.constant 0 : index
    %c0_17 = arith.constant 0 : index
    %46 = vector.load %arg4[%c0_16, %c0_17] : memref<1x1xf32, #tpu.memory_space<vmem>>, vector<1x1xf32>
    tpu.vector_store %arg4[%c0_16, %c0_17], %45 {strides = array<i32>} : memref<1x1xf32, #tpu.memory_space<vmem>>, vector<1x1xf32>,
    %c0_i32_18 = arith.constant 0 : i32
    %47 = arith.cmpi eq, %arg0, %c0_i32_18 : i32
    %48 = arith.extui %47 : i1 to i32
    %c0_i32_19 = arith.constant 0 : i32
    %49 = arith.cmpi ne, %48, %c0_i32_19 : i32
    scf.if %49 {
      %c0_20 = arith.constant 0 : index
      %c0_21 = arith.constant 0 : index
      %50 = vector.load %arg4[%c0_20, %c0_21] : memref<1x1xf32, #tpu.memory_space<vmem>>, vector<1x1xf32>
      %cst_22 = arith.constant 1.250000e-01 : f32
      %51 = vector.broadcast %cst_22 : f32 to vector<1x1xf32>
      %52 = arith.mulf %50, %51 : vector<1x1xf32>
      %c0_23 = arith.constant 0 : index
      %c0_24 = arith.constant 0 : index
      %53 = vector.load %arg3[%c0_23, %c0_24] : memref<1x1xf32, #tpu.memory_space<vmem>>, vector<1x1xf32>
      tpu.vector_store %arg3[%c0_23, %c0_24], %52 {strides = array<i32>} : memref<1x1xf32, #tpu.memory_space<vmem>>, vector<1x1xf32>,
    } else {
    }
    return
  }
  func.func @transform_0(%arg0: i32) -> (i32, i32) {
    %c0_i32 = arith.constant 0 : i32
    %c0_i32_0 = arith.constant 0 : i32
    return %arg0, %c0_i32 : i32, i32
  }
  func.func @transform_1(%arg0: i32) -> (i32, i32) {
    %c0_i32 = arith.constant 0 : i32
    %c0_i32_0 = arith.constant 0 : i32
    return %arg0, %c0_i32 : i32, i32
  }
  func.func @transform_2(%arg0: i32) -> (i32, i32) {
    %c0_i32 = arith.constant 0 : i32
    %c0_i32_0 = arith.constant 0 : i32
    %c0_i32_1 = arith.constant 0 : i32
    return %c0_i32, %c0_i32_0 : i32, i32
  }
}

</mosaic_0001>

<llo_original>
// kernel: tpu_custom_call.1
$region0: #{tpu_custom_call.1}
  #allocation0 [shape = 'u32[]', space=smem, size = 0x4, offset = 0x4, fixed_abs, tag = 'smem constant byte address 0x4 - core index']
  #allocation1 [shape = 'u32[144,128]{1,0:T(1,128)}', space=vmem, size = 0x12000, scoped, tag = 'internal scratch']
  #allocation2 [shape = 'f32[1,1]{1,0:T(1,128)}', space=vmem, size = 0x200, scoped, tag = 'scratch operand']
  %s0 = inlined_call_operand.vmem [shape: f32[8,16], index: 0, kind: input, shape index: {}]
  %s1 = inlined_call_operand.vmem [shape: s32[8,1], index: 1, kind: input, shape index: {}]
  %s2 = inlined_call_operand.hbm [shape: f32[1,1], index: 2, kind: output, shape index: {}]
  %s3 = sld [smem:[#allocation0]]
  $region26: #{tpu_custom_call.1} parent=0
    _
  %s5 = ssub.s32 1, %s3
  %s6 = scalar_select 0, %s5, %s3
  $region1: #{tpu_custom_call.1} parent=0
    #allocation3 [shape = 'u8[512]{0}', space=vmem, size = 0x400, scoped, tag = 'output window, operand 0, single buffered']
    #allocation4 [shape = 's32[1]{0}', space=sflag, size = 0x4, scoped, tag = 'scoped memory for tpu_custom_call.1']
    %7 = vsyncpa [#allocation4], 0
    // Predicated region
    $region2: #{tpu_custom_call.1} parent=1 // pred_check
      _
    $region3: #{tpu_custom_call.1} parent=1 // pred_check_branch
      %9 = sbr.rel (0) target = $region5
    $region4: #{tpu_custom_call.1} parent=1 // pred_region
      _
    $region5: #{tpu_custom_call.1} parent=1 // pred_fallthru
      _
    // Predicated region
    $region6: #{tpu_custom_call.1} parent=1 // pred_check
      _
    $region7: #{tpu_custom_call.1} parent=1 // pred_check_branch
      %11 = sbr.rel (0) target = $region9
    $region8: #{tpu_custom_call.1} parent=1 // pred_region
      _
    $region9: #{tpu_custom_call.1} parent=1 // pred_fallthru
      _
    %v12 = vld [vmem:[%s0] sm:$0xff]
    %v13 = vld [vmem:[%s1] sm:$0xff]
    %vm14 = vcmask 130048
    %v15 = vsel %vm14, %v12, -inf
    %16 = vmax.xlane.f32.xlu0 %v15
    %v17 = vpop.xlane.xlu0 %16
    %v18 = vsub.f32 %v12, %v17
    %v19 = vmul.f32 %v18, 1.442695
    %v20 = vpow.pop %v19
    %v21 = vsel %vm14, %v20, 0.0
    %22 = vadd.xlane.f32.xlu0 %v21
    %v23 = vpop.xlane.xlu0 %22
    %v24 = vlog2.pop %v23
    %v25 = vmul.f32 %v24, 0.6931472
    %v26 = vlaneseq
    %v27 = vand.u32 %v26, 127
    %28 = vset.pattern.permute.xlu0 0
    %29 = vperm.xlu0 %28, %v13
    %v30 = vpop.permute.xlu0 %29
    %vm31 = vcmp.eq.s32.totalorder %v27, %v30
    %v32 = vsel %vm31, %v18, 0.0
    %v33 = vsel %vm14, %v32, 0.0
    %34 = vadd.xlane.f32.xlu0 %v33
    %v35 = vpop.xlane.xlu0 %34
    %v36 = vsel %vm14, %v18, 0.0
    %37 = vadd.xlane.f32.xlu0 %v36
    %v38 = vpop.xlane.xlu0 %37
    %v39 = vmul.f32 %v38, 0.0625
    %v40 = vsub.f32 %v25, %v35
    %v41 = vmul.f32 %v40, 0.9
    %v42 = vsub.f32 %v25, %v39
    %v43 = vmul.f32 %v42, 0.1
    %v44 = vadd.f32 %v41, %v43
    %s45 = smul.u32 0, 8
    %v46 = vlaneseq
    %v47 = vshrl.u32 %v46, 7
    %v48 = vstv %s45
    %v49 = vadd.s32 %v48, %v47
    %vm50 = vcmp.lt.s32.totalorder %v49, 8
    %v51 = vsel %vm50, %v44, 0.0
    %vm52 = vcmask 7168
    %v53 = vsel %vm52, %v51, 0.0
    %54 = vadd.xlane.f32.xlu0 %v53
    %v55 = vpop.xlane.xlu0 %54
    %v56 = vrot.slane %v55, 4
    %v57 = vadd.f32 %v55, %v56
    %v58 = vrot.slane %v57, 2
    %v59 = vadd.f32 %v57, %v58
    %v60 = vrot.slane %v59, 1
    %v61 = vadd.f32 %v59, %v60
    %s62 = vtos %v61
    %p63 = scmp.eq.s32.totalorder 0, 0
    // Predicated region
    $region10: #{tpu_custom_call.1} parent=1 // pred_check
      %p64 = pneg %p63
    $region11: #{tpu_custom_call.1} parent=1 // pred_check_branch
      %66 = sbr.rel (%p64) target = $region13
    $region12: #{tpu_custom_call.1} parent=1 // pred_region
      %vm67 = vcmask 0
      %68 = vst.msk [vmem:[#allocation2] sm:$0x1] %vm67, 0.0
    $region13: #{tpu_custom_call.1} parent=1 // pred_fallthru
      _
    %v69 = vld [vmem:[#allocation2] sm:$0x1]
    %v70 = vstv %s62
    %v71 = vadd.f32 %v69, %v70
    %vm72 = vcmask 0
    %73 = vst.msk [vmem:[#allocation2] sm:$0x1] %vm72, %v71
    // Predicated region
    $region14: #{tpu_custom_call.1} parent=1 // pred_check
      %p74 = pneg %p63
    $region15: #{tpu_custom_call.1} parent=1 // pred_check_branch
      %76 = sbr.rel (%p74) target = $region17
    $region16: #{tpu_custom_call.1} parent=1 // pred_region
      %v77 = vld [vmem:[#allocation2] sm:$0x1]
      %v78 = vmul.f32 %v77, 0.125
      %79 = vst.msk [vmem:[#allocation3] sm:$0x1] %vm72, %v78
    $region17: #{tpu_custom_call.1} parent=1 // pred_fallthru
      _
    // Predicated region
    $region18: #{tpu_custom_call.1} parent=1 // pred_check
      _
    $region19: #{tpu_custom_call.1} parent=1 // pred_check_branch
      %81 = sbr.rel (0) target = $region21
    $region20: #{tpu_custom_call.1} parent=1 // pred_region
      %s83 = ssub.s32 16, 16
      %84 = vsyncadd [#allocation4], %s83
      %s86 = sshll.u32 [#allocation3], 4
      %s87 = int_to_ptr.vmem [resolvable:$true] %s86
      %89 = dma.vmem_to_hbm [thread:$0]  %s87, 16, %s2, [#allocation4]
    $region21: #{tpu_custom_call.1} parent=1 // pred_fallthru
      _
    // Predicated region
    $region22: #{tpu_custom_call.1} parent=1 // pred_check
      _
    $region23: #{tpu_custom_call.1} parent=1 // pred_check_branch
      %91 = sbr.rel (0) target = $region25
    $region24: #{tpu_custom_call.1} parent=1 // pred_region
      %92 = dma.done [#allocation4], 16
    $region25: #{tpu_custom_call.1} parent=1 // pred_fallthru
      _
    %93 = vsyncpa [#allocation4], 1

</llo_original>
